<compile_context>
chip_gen: v7x
topology: tpu7x:2x2x1
jax: 0.10.0
libtpu: 0.0.40
codegen_flags: <defaults>
</compile_context>

<pallas_src>
import functools

import jax
import jax.numpy as jnp
from jax import lax
from jax.experimental import pallas as pl
from jax.experimental.pallas import tpu as pltpu


def _round_up(x, m):
    return ((x + m - 1) // m) * m


def _vmem_budget_bytes():
    """~75% of physical VMEM (v5e/v6e: ~96 MiB, v7x: ~48 MiB); v7x-safe fallback."""
    try:
        cap = int(pltpu.get_tpu_info().vmem_capacity_bytes)
    except Exception:
        cap = 64 << 20
    return max(int(cap * 3 // 4), 32 << 20)


def _tile_footprint_bytes(tm, tn, H, out_itemsize):
    f32, bf16 = 4, 2
    return (2 * H * tn * bf16              # projection weight blocks (bf16, double-buffered)
            + 2 * H * 128 * f32            # lane-replicated gate weight (f32)
            + 2 * tm * H * f32             # prev_hidden tiles
            + 2 * tm * tn * f32            # orig-embedding tiles
            + 2 * tm * tn * out_itemsize   # effective-embedding tiles
            + 2 * tm * tn * f32            # in-kernel f32 temporaries
            + 4 * tm * 128 * f32)          # noise / gate lane-padded buffers


def _select_tiles(M, H, E, budget, out_itemsize):
    """Pick (tm, tn).

    1. Prefer a VMEM-resident projection weight (tn == E, DMA'd exactly once)
       with the largest tm that fits -> no redundant weight re-reads.
    2. Otherwise tile E (requires E % 128 == 0, true for real embedding dims)
       with large tm to cut the number of weight re-reads.
    """
    m_cap = _round_up(max(M, 1), 16)
    for tm in (1024, 512, 256, 128, 64, 32, 16):
        tm_e = min(tm, m_cap)
        if _tile_footprint_bytes(tm_e, E, H, out_itemsize) <= budget:
            return tm_e, E
    if E % 128 == 0:
        for tm, tn in ((512, 1024), (512, 512), (256, 512), (256, 256),
                       (128, 256), (128, 128), (64, 128), (32, 128), (16, 128)):
            tm_e = min(tm, m_cap)
            if _tile_footprint_bytes(tm_e, tn, H, out_itemsize) <= budget:
                return tm_e, tn
    # TODO(synk): very large E that is not a multiple of 128 cannot be tiled
    # on the lane axis; fall back to a full-E block.
    return min(16, m_cap), (128 if E % 128 == 0 else E)


def _gated_kernel(prev_ref, orig_ref, noise_ref, projw_ref, gatew_ref,
                  gateb_ref, eff_ref, gate_ref, *, temperature, hard, eps):
    j = pl.program_id(1)

    # The gate depends only on the M tile: compute it once per i-tile (j == 0)
    # and keep it in the revisited (tm, 1) gate output block for later j steps.
    @pl.when(j == 0)
    def _():
        x32 = prev_ref[...].astype(jnp.float32)                   # (tm, H)
        # Gate matvec on the MXU in f32; the gate weight is replicated across
        # all 128 lanes, so every lane already holds the logit (no XLU reduce).
        logits = jnp.dot(x32, gatew_ref[...],
                         preferred_element_type=jnp.float32)[:, :1]
        logits = logits + gateb_ref[0, 0]
        u = noise_ref[...]                                        # (tm, 1) f32
        # eps placement matches the reference gumbel_sigmoid exactly:
        # -log(-log(u + eps) + eps)
        gumbel = -jnp.log(-jnp.log(u + eps) + eps)
        y_soft = jax.nn.sigmoid((logits + gumbel) / temperature)
        if hard:
            # TODO(synk): forward-only hard gate; the straight-through
            # estimator ((y_hard - y_soft).detach() + y_soft) would need a
            # custom_vjp for training use.
            gate = jnp.where(y_soft > 0.5, 1.0, 0.0).astype(y_soft.dtype)
        else:
            gate = y_soft
        gate_ref[...] = gate

    g = gate_ref[...]                                             # (tm, 1) f32
    o = orig_ref[...].astype(jnp.float32)                         # (tm, tn)
    # Projection tile on the MXU: bf16 operands, f32 accumulation.
    p = jnp.dot(prev_ref[...].astype(jnp.bfloat16), projw_ref[...],
                preferred_element_type=jnp.float32)               # (tm, tn)
    # 3-op blend: orig + g*(proj - orig)
    eff_ref[...] = (o + g * (p - o)).astype(eff_ref.dtype)


def pack_gating_params(proj_w_t, gate_w, gate_b):
    """One-time parameter packing. Call ONCE at parameter-prep time, not per step.

    proj_w_t : (H, E) projection weight, pre-transposed (x @ proj_w_t)
    gate_w   : (1, H) gate_linear weight
    gate_b   : gate_linear bias (scalar / (1,) / (1,1)); module inits to -3.0
    """
    H = proj_w_t.shape[0]
    projw = proj_w_t.astype(jnp.bfloat16)                                # (H, E)
    # Replicate the gate weight across all 128 lanes: the MXU matvec then
    # yields the logit in every lane -> no cross-lane reduce in the kernel.
    gatew = jnp.asarray(jnp.broadcast_to(
        gate_w.reshape(H, 1).astype(jnp.float32), (H, 128)))             # (H, 128)
    gateb = jnp.asarray(gate_b, jnp.float32).reshape(1, 1)               # (1, 1)
    return projw, gatew, gateb


def sparse_gated_embeddings(prev_hidden, orig_embeds, noise_u, packed_params,
                            *, temperature, hard=False, eps=1e-10,
                            out_dtype=None):
    """Fused gating block of SparseGatedModel.forward.

    prev_hidden   : (B, S, H)  prev_step_last_hidden_state
    orig_embeds   : (B, S, E)  current_token_original_embeddings
    noise_u       : (B, S, 1)  uniform [0,1) noise (torch.rand_like equivalent)
    packed_params : pack_gating_params(...) output (pre-packed once)
    out_dtype     : defaults to orig_embeds.dtype; pass jnp.bfloat16 to halve
                    the dominant effective-embedding writeback stream.

    Returns (effective_embeddings (B,S,E), gate_values (B,S,1)).
    """
    projw, gatew, gateb = packed_params
    B, S, H = prev_hidden.shape
    E = orig_embeds.shape[-1]
    M = B * S
    out_dtype = orig_embeds.dtype if out_dtype is None else jnp.dtype(out_dtype)

    # No padded copies: reshape only (free for contiguous arrays). The grid
    # uses cdiv; Pallas masks the partial last M tile's writes.
    prev2 = prev_hidden.reshape(M, H)
    orig2 = orig_embeds.reshape(M, E)
    noise2 = noise_u.reshape(M, 1).astype(jnp.float32)

    budget = _vmem_budget_bytes()
    tm, tn = _select_tiles(M, H, E, budget, jnp.dtype(out_dtype).itemsize)

    # v7x has two TensorCores: make sure the "parallel" M axis has >= 2 tiles
    # when M is big enough to split (heuristic: small VMEM => v7x-like chip).
    if budget <= (48 << 20) and M >= 64 and pl.cdiv(M, tm) < 2:
        tm = max(16, _round_up(pl.cdiv(M, 2), 16))

    grid = (pl.cdiv(M, tm), pl.cdiv(E, tn))

    kernel = functools.partial(_gated_kernel, temperature=float(temperature),
                               hard=bool(hard), eps=float(eps))

    eff2, gate2 = pl.pallas_call(
        kernel,
        out_shape=(jax.ShapeDtypeStruct((M, E), out_dtype),
                   jax.ShapeDtypeStruct((M, 1), jnp.float32)),
        grid_spec=pltpu.PrefetchScalarGridSpec(
            num_scalar_prefetch=0,
            grid=grid,
            in_specs=[
                pl.BlockSpec((tm, H), lambda i, j: (i, 0)),          # prev hidden
                pl.BlockSpec((tm, tn), lambda i, j: (i, j)),         # orig embeds
                pl.BlockSpec((tm, 1), lambda i, j: (i, 0)),          # uniform noise
                pl.BlockSpec((H, tn), lambda i, j: (0, j)),          # projection W
                pl.BlockSpec((H, 128), lambda i, j: (0, 0)),         # gate W (replicated)
                pl.BlockSpec(memory_space=pltpu.MemorySpace.SMEM),   # gate bias
            ],
            out_specs=[
                pl.BlockSpec((tm, tn), lambda i, j: (i, j)),         # effective embeds
                pl.BlockSpec((tm, 1), lambda i, j: (i, 0)),          # gate values
            ],
        ),
        compiler_params=pltpu.CompilerParams(
            dimension_semantics=("parallel", "arbitrary"),
            vmem_limit_bytes=int(budget)),
    )(prev2, orig2, noise2, projw, gatew, gateb)

    return eff2.reshape(B, S, E), gate2.reshape(B, S, 1)


def _reference(prev_hidden, orig_embeds, noise_u, proj_w_t, gate_w, gate_b,
               temperature, hard, eps=1e-10):
    """Pure-JAX reference matching the kernel numerics (f32 gate matvec, bf16
    projection matmul with f32 accumulation, f32 sigmoid/blend)."""
    B, S, H = prev_hidden.shape
    x = prev_hidden.reshape(-1, H)
    logits = jnp.dot(x.astype(jnp.float32),
                     gate_w.reshape(H, 1).astype(jnp.float32),
                     precision=lax.Precision.HIGHEST)
    logits = logits.reshape(B, S, 1) + jnp.asarray(gate_b, jnp.float32).reshape(())
    gumbel = -jnp.log(-jnp.log(noise_u + eps) + eps)
    y_soft = jax.nn.sigmoid((logits + gumbel) / temperature)
    gate = jnp.where(y_soft > 0.5, 1.0, 0.0) if hard else y_soft
    proj = jnp.einsum('bsh,he->bse', prev_hidden.astype(jnp.bfloat16),
                      proj_w_t.astype(jnp.bfloat16),
                      preferred_element_type=jnp.float32)
    eff = orig_embeds + gate * (proj - orig_embeds)
    return eff, gate


if __name__ == "__main__":
    # Small shapes consistent with the forward: batch=2, seq=8,
    # hidden_size=32, embedding_dim=32.
    B, S, H, E = 2, 8, 32, 32
    temperature = 0.5
    hard = False

    key = jax.random.PRNGKey(0)
    k_prev, k_orig, k_noise, k_proj, k_gate = jax.random.split(key, 5)

    prev_hidden = jax.random.normal(k_prev, (B, S, H), dtype=jnp.float32)
    orig_embeds = jax.random.normal(k_orig, (B, S, E), dtype=jnp.float32)
    # torch.rand_like(logits) equivalent: uniform [0,1) noise, shape (B,S,1)
    noise_u = jax.random.uniform(k_noise, (B, S, 1), dtype=jnp.float32)

    # projection: Linear(hidden_size, embedding_dim, bias=False) -> W (E,H),
    # stored transposed as (H,E) so the kernel does x @ W^T directly.
    proj_w_t = (jax.random.normal(k_proj, (H, E), dtype=jnp.float32)
                / jnp.sqrt(jnp.float32(H)))
    # gate_linear: Linear(hidden_size, 1), bias init to -3.0
    gate_w = (jax.random.normal(k_gate, (1, H), dtype=jnp.float32)
              / jnp.sqrt(jnp.float32(H)))
    gate_b = jnp.full((1, 1), -3.0, dtype=jnp.float32)

    # One-time parameter packing (hoisted out of the per-step call).
    packed = pack_gating_params(proj_w_t, gate_w, gate_b)

    eff, gate = sparse_gated_embeddings(
        prev_hidden, orig_embeds, noise_u, packed,
        temperature=temperature, hard=hard)
    jax.block_until_ready((eff, gate))

    eff_exp, gate_exp = _reference(prev_hidden, orig_embeds, noise_u,
                                   proj_w_t, gate_w, gate_b, temperature, hard)
    assert eff.shape == (B, S, E) and gate.shape == (B, S, 1)
    assert jnp.allclose(gate, gate_exp, atol=5e-3, rtol=5e-3), \
        float(jnp.max(jnp.abs(gate - gate_exp)))
    assert jnp.allclose(eff, eff_exp, atol=2e-2, rtol=2e-2), \
        float(jnp.max(jnp.abs(eff - eff_exp)))

    print("KERNEL_OK")
</pallas_src>

<mosaic_0001>
module attributes {stable_mosaic.version = 11 : i64} {
  func.func @_gated_kernel(%arg0: i32, %arg1: i32, %arg2: memref<16x32xf32, #tpu.memory_space<vmem>>, %arg3: memref<16x32xf32, #tpu.memory_space<vmem>>, %arg4: memref<16x1xf32, #tpu.memory_space<vmem>>, %arg5: memref<32x32xbf16, #tpu.memory_space<vmem>>, %arg6: memref<32x128xf32, #tpu.memory_space<vmem>>, %arg7: memref<1x1xf32, #tpu.memory_space<smem>>, %arg8: memref<16x32xf32, #tpu.memory_space<vmem>>, %arg9: memref<16x1xf32, #tpu.memory_space<vmem>>) attributes {dimension_semantics = [#tpu.dimension_semantics<parallel>, #tpu.dimension_semantics<arbitrary>], iteration_bounds = array<i64: 1, 1>, scalar_prefetch = 0 : i64, scratch_operands = 0 : i64, tpu.core_type = #tpu.core_type<tc>, window_params = [{transform_indices = @transform_0, window_bounds = array<i64: 16, 32>}, {transform_indices = @transform_1, window_bounds = array<i64: 16, 32>}, {transform_indices = @transform_2, window_bounds = array<i64: 16, 1>}, {transform_indices = @transform_3, window_bounds = array<i64: 32, 32>}, {pipeline_mode = #tpu.pipeline_mode<synchronous>, transform_indices = @transform_4, window_bounds = array<i64: 32, 128>}, {transform_indices = @transform_5, window_bounds = array<i64: 1, 1>}, {transform_indices = @transform_6, window_bounds = array<i64: 16, 32>}, {transform_indices = @transform_7, window_bounds = array<i64: 16, 1>}]} {
    %c0_i32 = arith.constant 0 : i32
    %0 = arith.cmpi eq, %arg1, %c0_i32 : i32
    %1 = arith.extui %0 : i1 to i32
    %c0_i32_0 = arith.constant 0 : i32
    %2 = arith.cmpi ne, %1, %c0_i32_0 : i32
    scf.if %2 {
      %c0_10 = arith.constant 0 : index
      %c0_11 = arith.constant 0 : index
      %14 = vector.load %arg2[%c0_10, %c0_11] : memref<16x32xf32, #tpu.memory_space<vmem>>, vector<16x32xf32>
      %c0_12 = arith.constant 0 : index
      %c0_13 = arith.constant 0 : index
      %15 = vector.load %arg6[%c0_12, %c0_13] : memref<32x128xf32, #tpu.memory_space<vmem>>, vector<32x128xf32>
      %cst_14 = arith.constant dense<0.000000e+00> : vector<16x128xf32>
      %16 = tpu.matmul %14, %15, %cst_14 {dimension_numbers = #tpu.dot_dimension_numbers<[1], [0], [0], [1], [0, 0, 1, 1], [], []>} : vector<16x32xf32>, vector<32x128xf32>, vector<16x128xf32> -> vector<16x128xf32>
      %17 = vector.extract_strided_slice %16 {offsets = [0, 0], sizes = [16, 1], strides = [1, 1]} : vector<16x128xf32> to vector<16x1xf32>
      %c0_15 = arith.constant 0 : index
      %c0_16 = arith.constant 0 : index
      %18 = memref.load %arg7[%c0_15, %c0_16] : memref<1x1xf32, #tpu.memory_space<smem>>
      %19 = vector.broadcast %18 : f32 to vector<16x1xf32>
      %20 = arith.addf %17, %19 : vector<16x1xf32>
      %c0_17 = arith.constant 0 : index
      %c0_18 = arith.constant 0 : index
      %21 = vector.load %arg4[%c0_17, %c0_18] : memref<16x1xf32, #tpu.memory_space<vmem>>, vector<16x1xf32>
      %cst_19 = arith.constant 1.000000e-10 : f32
      %22 = vector.broadcast %cst_19 : f32 to vector<16x1xf32>
      %23 = arith.addf %21, %22 : vector<16x1xf32>
      %24 = math.log %23 : vector<16x1xf32>
      %cst_20 = arith.constant 0.000000e+00 : f32
      %25 = vector.broadcast %cst_20 : f32 to vector<16x1xf32>
      %26 = arith.subf %25, %24 : vector<16x1xf32>
      %cst_21 = arith.constant 1.000000e-10 : f32
      %27 = vector.broadcast %cst_21 : f32 to vector<16x1xf32>
      %28 = arith.addf %26, %27 : vector<16x1xf32>
      %29 = math.log %28 : vector<16x1xf32>
      %cst_22 = arith.constant 0.000000e+00 : f32
      %30 = vector.broadcast %cst_22 : f32 to vector<16x1xf32>
      %31 = arith.subf %30, %29 : vector<16x1xf32>
      %32 = arith.addf %20, %31 : vector<16x1xf32>
      %cst_23 = arith.constant 5.000000e-01 : f32
      %33 = vector.broadcast %cst_23 : f32 to vector<16x1xf32>
      %34 = arith.divf %32, %33 : vector<16x1xf32>
      %35 = arith.negf %34 : vector<16x1xf32>
      %36 = math.exp %35 : vector<16x1xf32>
      %cst_24 = arith.constant 1.000000e+00 : f32
      %37 = vector.broadcast %cst_24 : f32 to vector<16x1xf32>
      %38 = arith.addf %37, %36 : vector<16x1xf32>
      %39 = arith.divf %37, %38 : vector<16x1xf32>
      %c0_25 = arith.constant 0 : index
      %c0_26 = arith.constant 0 : index
      %40 = vector.load %arg9[%c0_25, %c0_26] : memref<16x1xf32, #tpu.memory_space<vmem>>, vector<16x1xf32>
      tpu.vector_store %arg9[%c0_25, %c0_26], %39 {strides = array<i32>} : memref<16x1xf32, #tpu.memory_space<vmem>>, vector<16x1xf32>,
    } else {
    }
    %c0 = arith.constant 0 : index
    %c0_1 = arith.constant 0 : index
    %3 = vector.load %arg9[%c0, %c0_1] : memref<16x1xf32, #tpu.memory_space<vmem>>, vector<16x1xf32>
    %c0_2 = arith.constant 0 : index
    %c0_3 = arith.constant 0 : index
    %4 = vector.load %arg3[%c0_2, %c0_3] : memref<16x32xf32, #tpu.memory_space<vmem>>, vector<16x32xf32>
    %c0_4 = arith.constant 0 : index
    %c0_5 = arith.constant 0 : index
    %5 = vector.load %arg2[%c0_4, %c0_5] : memref<16x32xf32, #tpu.memory_space<vmem>>, vector<16x32xf32>
    %6 = arith.truncf %5 : vector<16x32xf32> to vector<16x32xbf16>
    %c0_6 = arith.constant 0 : index
    %c0_7 = arith.constant 0 : index
    %7 = vector.load %arg5[%c0_6, %c0_7] : memref<32x32xbf16, #tpu.memory_space<vmem>>, vector<32x32xbf16>
    %cst = arith.constant dense<0.000000e+00> : vector<16x32xf32>
    %8 = tpu.matmul %6, %7, %cst {dimension_numbers = #tpu.dot_dimension_numbers<[1], [0], [0], [1], [0, 0, 1, 1], [], []>} : vector<16x32xbf16>, vector<32x32xbf16>, vector<16x32xf32> -> vector<16x32xf32>
    %9 = arith.subf %8, %4 : vector<16x32xf32>
    %10 = vector.broadcast %3 : vector<16x1xf32> to vector<16x32xf32>
    %11 = arith.mulf %10, %9 : vector<16x32xf32>
    %12 = arith.addf %4, %11 : vector<16x32xf32>
    %c0_8 = arith.constant 0 : index
    %c0_9 = arith.constant 0 : index
    %13 = vector.load %arg8[%c0_8, %c0_9] : memref<16x32xf32, #tpu.memory_space<vmem>>, vector<16x32xf32>
    tpu.vector_store %arg8[%c0_8, %c0_9], %12 {strides = array<i32>} : memref<16x32xf32, #tpu.memory_space<vmem>>, vector<16x32xf32>,
    return
  }
  func.func @transform_0(%arg0: i32, %arg1: i32) -> (i32, i32) {
    %c0_i32 = arith.constant 0 : i32
    %c0_i32_0 = arith.constant 0 : i32
    return %arg0, %c0_i32 : i32, i32
  }
  func.func @transform_1(%arg0: i32, %arg1: i32) -> (i32, i32) {
    %c0_i32 = arith.constant 0 : i32
    return %arg0, %arg1 : i32, i32
  }
  func.func @transform_2(%arg0: i32, %arg1: i32) -> (i32, i32) {
    %c0_i32 = arith.constant 0 : i32
    %c0_i32_0 = arith.constant 0 : i32
    return %arg0, %c0_i32 : i32, i32
  }
  func.func @transform_3(%arg0: i32, %arg1: i32) -> (i32, i32) {
    %c0_i32 = arith.constant 0 : i32
    %c0_i32_0 = arith.constant 0 : i32
    return %c0_i32, %arg1 : i32, i32
  }
  func.func @transform_4(%arg0: i32, %arg1: i32) -> (i32, i32) {
    %c0_i32 = arith.constant 0 : i32
    %c0_i32_0 = arith.constant 0 : i32
    %c0_i32_1 = arith.constant 0 : i32
    return %c0_i32, %c0_i32_0 : i32, i32
  }
  func.func @transform_5(%arg0: i32, %arg1: i32) -> (i32, i32) {
    %c0_i32 = arith.constant 0 : i32
    %c0_i32_0 = arith.constant 0 : i32
    %c0_i32_1 = arith.constant 0 : i32
    return %c0_i32, %c0_i32_0 : i32, i32
  }
  func.func @transform_6(%arg0: i32, %arg1: i32) -> (i32, i32) {
    %c0_i32 = arith.constant 0 : i32
    return %arg0, %arg1 : i32, i32
  }
  func.func @transform_7(%arg0: i32, %arg1: i32) -> (i32, i32) {
    %c0_i32 = arith.constant 0 : i32
    %c0_i32_0 = arith.constant 0 : i32
    return %arg0, %c0_i32 : i32, i32
  }
}

</mosaic_0001>

<llo_original>
// kernel: tpu_custom_call.1
$region0: #{tpu_custom_call.1}
  #allocation0 [shape = 'u32[]', space=smem, size = 0x4, offset = 0x4, fixed_abs, tag = 'smem constant byte address 0x4 - core index']
  #allocation1 [shape = 'u32[144,128]{1,0:T(1,128)}', space=vmem, size = 0x12000, scoped, tag = 'internal scratch']
  #allocation2 [shape = 'f32[1,1]{1,0:T(1,128)S(6)}', space=smem, size = 0x200, scoped, tag = 'scoped memory for tpu_custom_call.1']
  %s0 = inlined_call_operand.hbm [shape: f32[16,32], index: 0, kind: input, shape index: {}]
  %s1 = inlined_call_operand.hbm [shape: f32[16,32], index: 1, kind: input, shape index: {}]
  %s2 = inlined_call_operand.vmem [shape: f32[16,1], index: 2, kind: input, shape index: {}]
  %s3 = inlined_call_operand.hbm [shape: bf16[32,32], index: 3, kind: input, shape index: {}]
  %s4 = inlined_call_operand.vmem [shape: f32[32,128], index: 4, kind: input, shape index: {}]
  %s5 = inlined_call_operand.<no memory space> [shape: f32[1,1], index: 5, kind: input, shape index: {}]
  %s6 = inlined_call_operand.hbm [shape: f32[16,32], index: 6, kind: output, shape index: {0}]
  %s7 = inlined_call_operand.vmem [shape: f32[16,1], index: 7, kind: output, shape index: {1}]
  %8 = xla_tuple %s6, %s7
  %s9 = sld [smem:[#allocation0]]
  $region58: #{tpu_custom_call.1} parent=0
    _
  %s11 = ssub.s32 1, %s9
  %s12 = scalar_select 0, %s11, %s9
  %13 = sst [smem:[#allocation2]] %s5
  $region1: #{tpu_custom_call.1} parent=0
    #allocation3 [shape = 'u8[8192]{0}', space=vmem, size = 0x2000, scoped, tag = 'input window, operand 0, single buffered']
    #allocation4 [shape = 's32[1]{0}', space=sflag, size = 0x4, scoped, tag = 'scoped memory for tpu_custom_call.1']
    #allocation5 [shape = 's32[1]{0}', space=sflag, size = 0x4, scoped, tag = 'scoped memory for tpu_custom_call.1']
    #allocation6 [shape = 'u8[8192]{0}', space=vmem, size = 0x2000, scoped, tag = 'input window, operand 1, single buffered']
    #allocation7 [shape = 's32[1]{0}', space=sflag, size = 0x4, scoped, tag = 'scoped memory for tpu_custom_call.1']
    #allocation8 [shape = 'u8[8192]{0}', space=vmem, size = 0x2000, scoped, tag = 'input window, operand 3, single buffered']
    #allocation9 [shape = 'u8[8192]{0}', space=vmem, size = 0x2000, scoped, tag = 'output window, operand 0, single buffered']
    %14 = vsyncpa [#allocation4], 0
    %15 = vsyncpa [#allocation7], 0
    %16 = vsyncpa [#allocation5], 0
    // Predicated region
    $region2: #{tpu_custom_call.1} parent=1 // pred_check
      _
    $region3: #{tpu_custom_call.1} parent=1 // pred_check_branch
      %18 = sbr.rel (0) target = $region5
    $region4: #{tpu_custom_call.1} parent=1 // pred_region
      %s20 = ssub.s32 256, 256
      %21 = vsyncadd [#allocation4], %s20
      %s22 = sshll.u32 [#allocation3], 4
      %s23 = int_to_ptr.vmem [resolvable:$true] %s22
      %28 = dma.hbm_to_vmem [thread:$0]  %s0, 256, %s23, [#allocation4], 128, 128, 8
    $region5: #{tpu_custom_call.1} parent=1 // pred_fallthru
      _
    // Predicated region
    $region6: #{tpu_custom_call.1} parent=1 // pred_check
      _
    $region7: #{tpu_custom_call.1} parent=1 // pred_check_branch
      %30 = sbr.rel (0) target = $region9
    $region8: #{tpu_custom_call.1} parent=1 // pred_region
      %s32 = ssub.s32 256, 256
      %33 = vsyncadd [#allocation7], %s32
      %s34 = sshll.u32 [#allocation6], 4
      %s35 = int_to_ptr.vmem [resolvable:$true] %s34
      %40 = dma.hbm_to_vmem [thread:$0]  %s1, 256, %s35, [#allocation7], 128, 128, 8
    $region9: #{tpu_custom_call.1} parent=1 // pred_fallthru
      _
    // Predicated region
    $region10: #{tpu_custom_call.1} parent=1 // pred_check
      _
    $region11: #{tpu_custom_call.1} parent=1 // pred_check_branch
      %42 = sbr.rel (0) target = $region13
    $region12: #{tpu_custom_call.1} parent=1 // pred_region
      _
    $region13: #{tpu_custom_call.1} parent=1 // pred_fallthru
      _
    // Predicated region
    $region14: #{tpu_custom_call.1} parent=1 // pred_check
      _
    $region15: #{tpu_custom_call.1} parent=1 // pred_check_branch
      %44 = sbr.rel (0) target = $region17
    $region16: #{tpu_custom_call.1} parent=1 // pred_region
      %s46 = ssub.s32 256, 256
      %47 = vsyncadd [#allocation7], %s46
      %s48 = sshll.u32 [#allocation8], 4
      %s49 = int_to_ptr.vmem [resolvable:$true] %s48
      %54 = dma.hbm_to_vmem [thread:$0]  %s3, 256, %s49, [#allocation7], 64, 64, 4
    $region17: #{tpu_custom_call.1} parent=1 // pred_fallthru
      _
    // Predicated region
    $region18: #{tpu_custom_call.1} parent=1 // pred_check
      _
    $region19: #{tpu_custom_call.1} parent=1 // pred_check_branch
      %56 = sbr.rel (0) target = $region21
    $region20: #{tpu_custom_call.1} parent=1 // pred_region
      _
    $region21: #{tpu_custom_call.1} parent=1 // pred_fallthru
      _
    // Predicated region
    $region22: #{tpu_custom_call.1} parent=1 // pred_check
      _
    $region23: #{tpu_custom_call.1} parent=1 // pred_check_branch
      %58 = sbr.rel (0) target = $region25
    $region24: #{tpu_custom_call.1} parent=1 // pred_region
      _
    $region25: #{tpu_custom_call.1} parent=1 // pred_fallthru
      _
    // Predicated region
    $region26: #{tpu_custom_call.1} parent=1 // pred_check
      _
    $region27: #{tpu_custom_call.1} parent=1 // pred_check_branch
      %60 = sbr.rel (0) target = $region29
    $region28: #{tpu_custom_call.1} parent=1 // pred_region
      %61 = dma.done [#allocation4], 256
    $region29: #{tpu_custom_call.1} parent=1 // pred_fallthru
      _
    // Predicated region
    $region30: #{tpu_custom_call.1} parent=1 // pred_check
      _
    $region31: #{tpu_custom_call.1} parent=1 // pred_check_branch
      %63 = sbr.rel (0) target = $region33
    $region32: #{tpu_custom_call.1} parent=1 // pred_region
      %64 = dma.done [#allocation7], 256
    $region33: #{tpu_custom_call.1} parent=1 // pred_fallthru
      _
    // Predicated region
    $region34: #{tpu_custom_call.1} parent=1 // pred_check
      _
    $region35: #{tpu_custom_call.1} parent=1 // pred_check_branch
      %66 = sbr.rel (0) target = $region37
    $region36: #{tpu_custom_call.1} parent=1 // pred_region
      %67 = dma.done [#allocation7], 256
    $region37: #{tpu_custom_call.1} parent=1 // pred_fallthru
      _
    %p69 = scmp.eq.s32.totalorder 0, 0
    // Predicated region
    $region38: #{tpu_custom_call.1} parent=1 // pred_check
      %p70 = pneg %p69
    $region39: #{tpu_custom_call.1} parent=1 // pred_check_branch
      %72 = sbr.rel (%p70) target = $region41
    $region40: #{tpu_custom_call.1} parent=1 // pred_region
      %v73 = vld [vmem:[#allocation3] sm:$0xff]
      %v74 = vld [vmem:[#allocation3 + $0x8] sm:$0xff]
      %v75 = vld [vmem:[%s4] sm:$0xff]
      %v76 = vld [vmem:[%s4 + $0x8] sm:$0xff]
      %v77 = vld [vmem:[%s4 + $0x10] sm:$0xff]
      %v78 = vld [vmem:[%s4 + $0x18] sm:$0xff]
      %vm79 = vcmask 261120
      %v81 = vsel %vm79, %v73, 0
      %v84 = vsel %vm79, %v74, 0
      %86 = vmatprep.subr.mxu0 0.0
      %87 = vmatpush1.msra.mxu0 %v75
      %88 = vmatprep.subr.mxu0 0.0
      %89 = vmatpush1.msra.mxu0 %v76
      %90 = vmatprep.subr.mxu0 0.0
      %91 = vmatpush1.msra.mxu0 %v77
      %92 = vmatprep.subr.mxu0 0.0
      %93 = vmatpush1.msra.mxu0 %v78
      %94 = vmatprep.subr.mxu0 0.0
      %95 = vmatpush1.msra.mxu0 0.0
      %96 = vmatprep.subr.mxu0 0.0
      %97 = vmatpush1.msra.mxu0 0.0
      %98 = vmatprep.subr.mxu0 0.0
      %99 = vmatpush1.msra.mxu0 0.0
      %100 = vmatprep.subr.mxu0 0.0
      %101 = vmatpush1.msra.mxu0 0.0
      %102 = vmatprep.subr.mxu0 0.0
      %103 = vmatpush1.msra.mxu0 0.0
      %104 = vmatprep.subr.mxu0 0.0
      %105 = vmatpush1.msra.mxu0 0.0
      %106 = vmatprep.subr.mxu0 0.0
      %107 = vmatpush1.msra.mxu0 0.0
      %108 = vmatprep.subr.mxu0 0.0
      %109 = vmatpush1.msra.mxu0 0.0
      %110 = vmatprep.subr.mxu0 0.0
      %111 = vmatpush1.msra.mxu0 0.0
      %112 = vmatprep.subr.mxu0 0.0
      %113 = vmatpush1.msra.mxu0 0.0
      %114 = vmatprep.subr.mxu0 0.0
      %115 = vmatpush1.msra.mxu0 0.0
      %116 = vmatprep.subr.mxu0 0.0
      %117 = vmatpush1.msra.mxu0 0.0
      %118 = vmatprep.subr.mxu0 0.0
      %119 = vmatpush1.msra.mxu0 0.0
      %120 = vmatprep.subr.mxu0 0.0
      %121 = vmatpush1.msra.mxu0 0.0
      %122 = vmatprep.subr.mxu0 0.0
      %123 = vmatpush1.msra.mxu0 0.0
      %124 = vmatprep.subr.mxu0 0.0
      %125 = vmatpush1.msra.mxu0 0.0
      %126 = vmatprep.subr.mxu0 0.0
      %127 = vmatpush1.msra.mxu0 0.0
      %128 = vmatprep.subr.mxu0 0.0
      %129 = vmatpush1.msra.mxu0 0.0
      %130 = vmatprep.subr.mxu0 0.0
      %131 = vmatpush1.msra.mxu0 0.0
      %132 = vmatprep.subr.mxu0 0.0
      %133 = vmatpush1.msra.mxu0 0.0
      %134 = vmatprep.subr.mxu0 0.0
      %135 = vmatpush1.msra.mxu0 0.0
      %136 = vmatprep.subr.mxu0 0.0
      %137 = vmatpush1.msra.mxu0 0.0
      %138 = vmatprep.subr.mxu0 0.0
      %139 = vmatpush1.msra.mxu0 0.0
      %140 = vmatprep.subr.mxu0 0.0
      %141 = vmatpush1.msra.mxu0 0.0
      %142 = vmatprep.subr.mxu0 0.0
      %143 = vmatpush1.msra.mxu0 0.0
      %144 = vmatprep.subr.mxu0 0.0
      %145 = vmatpush1.msra.mxu0 0.0
      %146 = vmatprep.subr.mxu0 0.0
      %147 = vmatpush1.msra.mxu0 0.0
      %148 = vmatprep.subr.mxu0 0.0
      %149 = vmatpush1.msra.mxu0 0.0
      %150 = vmatprep.mubr.f32.mxu0 0.0
      %151 = vmatmul.mubr.f32.gmra.mrb[0].mxu0 %v81
      %v152 = vpop.f32.mrb[0].mxu0
      %v153 = vadd.f32 0.0, %v152
      %v154 = vpop.f32.mrb[0].mxu0
      %155 = vmatprep.mubr.f32.mxu0 0.0
      %156 = vmatmul.mubr.f32.gmra.mrb[0].mxu0 %v84
      %v157 = vpop.f32.mrb[0].mxu0
      %v158 = vadd.f32 0.0, %v157
      %v159 = vpop.f32.mrb[0].mxu0
      %160 = vdwg.mxu0
      %s161 = sld [smem:[#allocation2]]
      %v162 = vstv %s161
      %v163 = vadd.f32 %v153, %v162
      %v164 = vadd.f32 %v158, %v162
      %v165 = vld [vmem:[%s2] sm:$0xff]
      %v166 = vld [vmem:[%s2 + $0x8] sm:$0xff]
      %v167 = vadd.f32 %v165, 1e-10
      %v168 = vadd.f32 %v166, 1e-10
      %v169 = vlog2.pop %v167
      %v170 = vmul.f32 %v169, 0.6931472
      %v171 = vlog2.pop %v168
      %v172 = vmul.f32 %v171, 0.6931472
      %v173 = vsub.f32 0.0, %v170
      %v174 = vsub.f32 0.0, %v172
      %v175 = vadd.f32 %v173, 1e-10
      %v176 = vadd.f32 %v174, 1e-10
      %v177 = vlog2.pop %v175
      %v178 = vmul.f32 %v177, 0.6931472
      %v179 = vlog2.pop %v176
      %v180 = vmul.f32 %v179, 0.6931472
      %v181 = vsub.f32 0.0, %v178
      %v182 = vsub.f32 0.0, %v180
      %v183 = vadd.f32 %v163, %v181
      %v184 = vadd.f32 %v164, %v182
      %v185 = vrcp.pop 0.5
      %v186 = vmul.f32 %v183, %v185
      %v187 = vmul.f32 %v184, %v185
      %v188 = vxor.u32 %v186, 2147483648
      %v189 = vxor.u32 %v187, 2147483648
      %v190 = vmul.f32 %v188, 1.442695
      %v191 = vpow.pop %v190
      %v192 = vmul.f32 %v189, 1.442695
      %v193 = vpow.pop %v192
      %v194 = vadd.f32 %v191, 1.0
      %v195 = vadd.f32 %v193, 1.0
      %v196 = vrcp.pop %v194
      %v197 = vmul.f32 1.0, %v196
      %v198 = vrcp.pop %v195
      %v199 = vmul.f32 1.0, %v198
      %vm200 = vcmask 7168
      %201 = vst.msk [vmem:[%s7] sm:$0xff] %vm200, %v197
      %202 = vst.msk [vmem:[%s7 + $0x8] sm:$0xff] %vm200, %v199
    $region41: #{tpu_custom_call.1} parent=1 // pred_fallthru
      _
    %v203 = vld [vmem:[%s7] sm:$0xff]
    %v204 = vld [vmem:[%s7 + $0x8] sm:$0xff]
    %v205 = vld [vmem:[#allocation6] sm:$0xff]
    %v206 = vld [vmem:[#allocation6 + $0x8] sm:$0xff]
    %v207 = vld [vmem:[#allocation3] sm:$0xff]
    %v208 = vld [vmem:[#allocation3 + $0x8] sm:$0xff]
    %v209 = vpack.c.bf16 %v208, %v207
    %v210 = vld [vmem:[#allocation8] sm:$0xf]
    %v211 = vld [vmem:[#allocation8 + $0x4] sm:$0xf]
    %v212 = vld [vmem:[#allocation8 + $0x8] sm:$0xf]
    %v213 = vld [vmem:[#allocation8 + $0xc] sm:$0xf]
    %v218 = vunpack.c.l.b16 %v210
    %v219 = vunpack.c.l.b16 %v211
    %v220 = vunpack.c.l.b16 %v212
    %v221 = vunpack.c.l.b16 %v213
    %v222 = vpack.c.b16 %v219, %v218
    %v223 = vpack.c.b16 %v221, %v220
    %vm226 = vcmask 261120
    %v228 = vsel %vm226, %v209, 0
    %230 = vmatprep.subr.bf16.mxu0 0
    %231 = vmatpush1.bf16.msra.mxu0 %v222
    %232 = vmatprep.subr.bf16.mxu0 0
    %233 = vmatpush1.bf16.msra.mxu0 %v223
    %234 = vmatprep.subr.bf16.mxu0 0
    %235 = vmatpush1.bf16.msra.mxu0 0
    %236 = vmatprep.subr.bf16.mxu0 0
    %237 = vmatpush1.bf16.msra.mxu0 0
    %238 = vmatprep.subr.bf16.mxu0 0
    %239 = vmatpush1.bf16.msra.mxu0 0
    %240 = vmatprep.subr.bf16.mxu0 0
    %241 = vmatpush1.bf16.msra.mxu0 0
    %242 = vmatprep.subr.bf16.mxu0 0
    %243 = vmatpush1.bf16.msra.mxu0 0
    %244 = vmatprep.subr.bf16.mxu0 0
    %245 = vmatpush1.bf16.msra.mxu0 0
    %246 = vmatprep.subr.bf16.mxu0 0
    %247 = vmatpush1.bf16.msra.mxu0 0
    %248 = vmatprep.subr.bf16.mxu0 0
    %249 = vmatpush1.bf16.msra.mxu0 0
    %250 = vmatprep.subr.bf16.mxu0 0
    %251 = vmatpush1.bf16.msra.mxu0 0
    %252 = vmatprep.subr.bf16.mxu0 0
    %253 = vmatpush1.bf16.msra.mxu0 0
    %254 = vmatprep.subr.bf16.mxu0 0
    %255 = vmatpush1.bf16.msra.mxu0 0
    %256 = vmatprep.subr.bf16.mxu0 0
    %257 = vmatpush1.bf16.msra.mxu0 0
    %258 = vmatprep.subr.bf16.mxu0 0
    %259 = vmatpush1.bf16.msra.mxu0 0
    %260 = vmatprep.subr.bf16.mxu0 0
    %261 = vmatpush1.bf16.msra.mxu0 0
    %262 = vmatprep.mubr.bf16.mxu0 0
    %263 = vmatmul.mubr.bf16.gmra.mrb[0].mxu0 %v228
    %v264 = vpop.f32.mrb[0].mxu0
    %v265 = vadd.f32 0.0, %v264
    %v266 = vpop.f32.mrb[0].mxu0
    %v267 = vpop.f32.mrb[0].mxu0
    %v268 = vadd.f32 0.0, %v267
    %v269 = vpop.f32.mrb[0].mxu0
    %270 = vdwg.mxu0
    %v271 = vsub.f32 %v265, %v205
    %v272 = vsub.f32 %v268, %v206
    %274 = vset.pattern.permute.xlu0 0
    %275 = vperm.xlu0 %274, %v203
    %v276 = vpop.permute.xlu0 %275
    %279 = vset.pattern.permute.xlu0 0
    %280 = vperm.xlu0 %279, %v204
    %v281 = vpop.permute.xlu0 %280
    %v283 = vmul.f32 %v276, %v271
    %v284 = vmul.f32 %v281, %v272
    %v285 = vadd.f32 %v205, %v283
    %v286 = vadd.f32 %v206, %v284
    %287 = vst.msk [vmem:[#allocation9] sm:$0xff] %vm226, %v285
    %288 = vst.msk [vmem:[#allocation9 + $0x8] sm:$0xff] %vm226, %v286
    // Predicated region
    $region42: #{tpu_custom_call.1} parent=1 // pred_check
      _
    $region43: #{tpu_custom_call.1} parent=1 // pred_check_branch
      %290 = sbr.rel (0) target = $region45
    $region44: #{tpu_custom_call.1} parent=1 // pred_region
      %s292 = ssub.s32 256, 256
      %293 = vsyncadd [#allocation5], %s292
      %s294 = sshll.u32 [#allocation9], 4
      %s295 = int_to_ptr.vmem [resolvable:$true] %s294
      %300 = dma.vmem_to_hbm [thread:$0]  %s295, 256, %s6, [#allocation5], 128, 128, 8
    $region45: #{tpu_custom_call.1} parent=1 // pred_fallthru
      _
    // Predicated region
    $region46: #{tpu_custom_call.1} parent=1 // pred_check
      _
    $region47: #{tpu_custom_call.1} parent=1 // pred_check_branch
      %302 = sbr.rel (0) target = $region49
    $region48: #{tpu_custom_call.1} parent=1 // pred_region
      _
    $region49: #{tpu_custom_call.1} parent=1 // pred_fallthru
      _
    // Predicated region
    $region50: #{tpu_custom_call.1} parent=1 // pred_check
      _
    $region51: #{tpu_custom_call.1} parent=1 // pred_check_branch
      %304 = sbr.rel (0) target = $region53
    $region52: #{tpu_custom_call.1} parent=1 // pred_region
      %305 = dma.done [#allocation5], 256
    $region53: #{tpu_custom_call.1} parent=1 // pred_fallthru
      _
    // Predicated region
    $region54: #{tpu_custom_call.1} parent=1 // pred_check
      _
    $region55: #{tpu_custom_call.1} parent=1 // pred_check_branch
      %307 = sbr.rel (0) target = $region57
    $region56: #{tpu_custom_call.1} parent=1 // pred_region
      _
    $region57: #{tpu_custom_call.1} parent=1 // pred_fallthru
      _
    %308 = vsyncpa [#allocation4], 1
    %309 = vsyncpa [#allocation7], 1
    %310 = vsyncpa [#allocation5], 1

</llo_original>
